<compile_context>
chip_gen: v5e
topology: v5e:2x2
jax: 0.10.0
libtpu: 0.0.40
codegen_flags: <defaults>
</compile_context>

<pallas_src>
from functools import partial

import jax
import jax.numpy as jnp
import numpy as np
from jax.experimental import pallas as pl
from jax.experimental.pallas import tpu as pltpu


def _mha_kernel(x_ref, wqkv_ref, bqkv_ref, wo_ref, bo_ref, o_ref, ctx_ref, *, num_heads):
    Bt, L, E = x_ref.shape
    H = num_heads
    hd = E // H
    M = Bt * L

    # Fused QKV projection: one bf16 MXU op with N = 3E, f32 accumulation.
    # (wqkv is pre-transposed and pre-scaled in the wrapper: y = x @ W.T + b, with the
    #  1/sqrt(hd) attention scale already folded into the Wq columns / bq.)
    x = x_ref[...].reshape(M, E).astype(jnp.bfloat16)
    qkv = jnp.dot(x, wqkv_ref[...], preferred_element_type=jnp.float32) + bqkv_ref[...]
    qkv = qkv.reshape(Bt, L, 3 * E)

    # Per-head attention. Static trip count; only the current head's s/p/ctx are live.
    for h in range(H):
        lo = h * hd
        q_h = qkv[:, :, lo:lo + hd].astype(jnp.bfloat16)
        k_h = qkv[:, :, E + lo:E + lo + hd].astype(jnp.bfloat16)
        v_h = qkv[:, :, 2 * E + lo:2 * E + lo + hd].astype(jnp.bfloat16)

        # Contract on the last dim of both operands -> no transposed copy of K.
        s = jnp.einsum('bqd,bkd->bqk', q_h, k_h,
                       preferred_element_type=jnp.float32)        # (Bt, L, L) f32
        s = s - jnp.max(s, axis=-1, keepdims=True)
        p = jnp.exp(s)
        p = p * pl.reciprocal(jnp.sum(p, axis=-1, keepdims=True), approx=True)

        ctx = jnp.einsum('bqk,bkd->bqd', p.astype(jnp.bfloat16), v_h,
                         preferred_element_type=jnp.float32)      # (Bt, L, hd) f32
        # Lane-slab store into the head-merge scratch (contiguous, no XLU shuffle).
        ctx_ref[:, lo:lo + hd] = ctx.reshape(M, hd)

    # The output projection IS the head merge: one K=E MXU matmul.
    y = jnp.dot(ctx_ref[...].astype(jnp.bfloat16), wo_ref[...],
                preferred_element_type=jnp.float32) + bo_ref[...]
    o_ref[...] = y.reshape(Bt, L, E).astype(o_ref.dtype)


def _pick_batch_tile(B, L, target_rows=512, score_budget_bytes=6 << 20):
    """Largest divisor of B with Bt*L near target_rows, >= 2 grid steps, and a bounded
    (Bt, L, L) score tile (s and p live simultaneously -> ~3x the raw f32 tile)."""
    bt = max(1, min(B, pl.cdiv(target_rows, L)))
    if B >= 2:
        bt = min(bt, B // 2)          # keep >= 2 grid steps so v7x's 2nd TC isn't idle
    while bt > 1 and 3 * bt * L * L * 4 > score_budget_bytes:
        bt -= 1
    while B % bt:
        bt -= 1
    return bt


def _vmem_limit_bytes(Bt, L, E):
    """Explicit scoped-VMEM budget from actual tile sizes (double-buffered I/O + weights)."""
    M = Bt * L
    weights = 2 * (E * 3 * E + E * E) * 2          # bf16 weights, double-buffered
    biases = 2 * (3 * E + E) * 4
    io = 2 * 2 * Bt * L * E * 4                    # x + out blocks, double-buffered, f32
    scratch = M * E * 4                            # f32 head-merge scratch
    tmps = M * 3 * E * (4 + 2)                     # f32 qkv + bf16 q/k/v slices
    scores = 3 * Bt * L * L * 4                    # s + p (+ bf16 p), one head live
    est = int(1.5 * (weights + biases + io + scratch + tmps + scores)) + (2 << 20)
    return max(32 << 20, min(est, 64 << 20))       # respect v7x's 64 MiB physical VMEM


def attention_block(x, params, num_heads=1):
    """Pallas equivalent of AttentionBlock.forward(query) (self-attention, no mask)."""
    B, L, E = x.shape
    assert E % num_heads == 0, "embed dim must be divisible by num_heads"
    hd = E // num_heads
    scale = 1.0 / float(np.sqrt(hd))

    w_in = params["in_proj_weight"]                # (3E, E), rows = [Wq; Wk; Wv]
    b_in = params["in_proj_bias"]                  # (3E,)
    # Fold the attention scale into Wq / bq (one-time host transform), pre-transpose,
    # and cast weights to bf16 so the MXU runs its native path.
    w_in = jnp.concatenate([w_in[:E] * scale, w_in[E:]], axis=0)
    b_in = jnp.concatenate([b_in[:E] * scale, b_in[E:]], axis=0)
    w_qkv = w_in.T.astype(jnp.bfloat16)            # (E, 3E): x @ w_qkv = [q | k | v]
    b_qkv = b_in.reshape(1, 3 * E).astype(jnp.float32)
    wo_t = params["out_proj_weight"].T.astype(jnp.bfloat16)   # (E, E)
    bo = params["out_proj_bias"].reshape(1, E).astype(jnp.float32)

    Bt = _pick_batch_tile(B, L)
    grid = (B // Bt,)
    M = Bt * L

    full = lambda shape: pl.BlockSpec(shape, lambda b: (0, 0))   # grid-invariant weights
    kernel = partial(_mha_kernel, num_heads=num_heads)

    return pl.pallas_call(
        kernel,
        out_shape=jax.ShapeDtypeStruct((B, L, E), x.dtype),
        grid=grid,
        in_specs=[
            pl.BlockSpec((Bt, L, E), lambda b: (b, 0, 0)),   # x: Bt sequences per step
            full((E, 3 * E)),                                # fused [Wq|Wk|Wv].T (bf16)
            full((1, 3 * E)),                                # fused bias (f32)
            full((E, E)),                                    # Wo.T (bf16)
            full((1, E)),                                    # bo (f32)
        ],
        out_specs=pl.BlockSpec((Bt, L, E), lambda b: (b, 0, 0)),
        scratch_shapes=[pltpu.VMEM((M, E), jnp.float32)],    # per-head context merge slab
        compiler_params=pltpu.CompilerParams(
            dimension_semantics=("parallel",),               # batch steps are independent
            vmem_limit_bytes=_vmem_limit_bytes(Bt, L, E),
        ),
    )(x, w_qkv, b_qkv, wo_t, bo)


def attention_block_ref(x, params, num_heads=1):
    """Pure-JAX reference matching torch.nn.MultiheadAttention (self-attn, no mask)."""
    B, L, E = x.shape
    hd = E // num_heads
    w_in, b_in = params["in_proj_weight"], params["in_proj_bias"]
    q = x @ w_in[0 * E:1 * E].T + b_in[0 * E:1 * E]
    k = x @ w_in[1 * E:2 * E].T + b_in[1 * E:2 * E]
    v = x @ w_in[2 * E:3 * E].T + b_in[2 * E:3 * E]
    q = q.reshape(B, L, num_heads, hd).transpose(0, 2, 1, 3)
    k = k.reshape(B, L, num_heads, hd).transpose(0, 2, 1, 3)
    v = v.reshape(B, L, num_heads, hd).transpose(0, 2, 1, 3)
    s = jnp.einsum("bhqd,bhkd->bhqk", q, k) / jnp.sqrt(jnp.float32(hd))
    p = jax.nn.softmax(s, axis=-1)
    ctx = jnp.einsum("bhqk,bhkd->bhqd", p, v).transpose(0, 2, 1, 3).reshape(B, L, E)
    return ctx @ params["out_proj_weight"].T + params["out_proj_bias"]


if __name__ == "__main__":
    B, L, E = 2, 8, 32

    key = jax.random.PRNGKey(0)
    kx, kw, kb, kwo, kbo = jax.random.split(key, 5)

    x = jax.random.normal(kx, (B, L, E), dtype=jnp.float32)
    params = {
        "in_proj_weight": 0.05 * jax.random.normal(kw, (3 * E, E), dtype=jnp.float32),
        "in_proj_bias": 0.01 * jax.random.normal(kb, (3 * E,), dtype=jnp.float32),
        "out_proj_weight": 0.05 * jax.random.normal(kwo, (E, E), dtype=jnp.float32),
        "out_proj_bias": 0.01 * jax.random.normal(kbo, (E,), dtype=jnp.float32),
    }

    # Tolerance covers bf16 MXU operands (f32 accumulation) and the EUP approximate
    # reciprocal in the softmax denominator; output magnitudes are O(0.1).
    for heads in (1, 4):                       # module default (1) + a multi-head config
        out = jax.block_until_ready(attention_block(x, params, num_heads=heads))
        ref = jax.block_until_ready(attention_block_ref(x, params, num_heads=heads))
        np.testing.assert_allclose(np.asarray(out), np.asarray(ref),
                                   rtol=2e-2, atol=2e-2)

    print("KERNEL_OK")
</pallas_src>

<mosaic_0001>
module attributes {stable_mosaic.version = 11 : i64} {
  func.func @_mha_kernel(%arg0: i32, %arg1: memref<1x8x32xf32, #tpu.memory_space<vmem>>, %arg2: memref<32x96xbf16, #tpu.memory_space<vmem>>, %arg3: memref<1x96xf32, #tpu.memory_space<vmem>>, %arg4: memref<32x32xbf16, #tpu.memory_space<vmem>>, %arg5: memref<1x32xf32, #tpu.memory_space<vmem>>, %arg6: memref<1x8x32xf32, #tpu.memory_space<vmem>>, %arg7: memref<8x32xf32, #tpu.memory_space<vmem>>) attributes {dimension_semantics = [#tpu.dimension_semantics<parallel>], iteration_bounds = array<i64: 2>, scalar_prefetch = 0 : i64, scratch_operands = 1 : i64, tpu.core_type = #tpu.core_type<tc>, window_params = [{transform_indices = @transform_0, window_bounds = array<i64: 1, 8, 32>}, {pipeline_mode = #tpu.pipeline_mode<synchronous>, transform_indices = @transform_1, window_bounds = array<i64: 32, 96>}, {pipeline_mode = #tpu.pipeline_mode<synchronous>, transform_indices = @transform_2, window_bounds = array<i64: 1, 96>}, {pipeline_mode = #tpu.pipeline_mode<synchronous>, transform_indices = @transform_3, window_bounds = array<i64: 32, 32>}, {pipeline_mode = #tpu.pipeline_mode<synchronous>, transform_indices = @transform_4, window_bounds = array<i64: 1, 32>}, {transform_indices = @transform_5, window_bounds = array<i64: 1, 8, 32>}]} {
    %c0 = arith.constant 0 : index
    %c0_0 = arith.constant 0 : index
    %c0_1 = arith.constant 0 : index
    %0 = vector.load %arg1[%c0, %c0_0, %c0_1] : memref<1x8x32xf32, #tpu.memory_space<vmem>>, vector<1x8x32xf32>
    %1 = vector.shape_cast %0 : vector<1x8x32xf32> to vector<8x32xf32>
    %2 = arith.truncf %1 : vector<8x32xf32> to vector<8x32xbf16>
    %c0_2 = arith.constant 0 : index
    %c0_3 = arith.constant 0 : index
    %3 = vector.load %arg2[%c0_2, %c0_3] : memref<32x96xbf16, #tpu.memory_space<vmem>>, vector<32x96xbf16>
    %cst = arith.constant dense<0.000000e+00> : vector<8x96xf32>
    %4 = tpu.matmul %2, %3, %cst {dimension_numbers = #tpu.dot_dimension_numbers<[1], [0], [0], [1], [0, 0, 1, 1], [], []>} : vector<8x32xbf16>, vector<32x96xbf16>, vector<8x96xf32> -> vector<8x96xf32>
    %c0_4 = arith.constant 0 : index
    %c0_5 = arith.constant 0 : index
    %5 = vector.load %arg3[%c0_4, %c0_5] : memref<1x96xf32, #tpu.memory_space<vmem>>, vector<1x96xf32>
    %6 = vector.broadcast %5 : vector<1x96xf32> to vector<8x96xf32>
    %7 = arith.addf %4, %6 : vector<8x96xf32>
    %8 = vector.shape_cast %7 : vector<8x96xf32> to vector<1x8x96xf32>
    %9 = vector.extract_strided_slice %8 {offsets = [0, 0, 0], sizes = [1, 8, 32], strides = [1, 1, 1]} : vector<1x8x96xf32> to vector<1x8x32xf32>
    %10 = arith.truncf %9 : vector<1x8x32xf32> to vector<1x8x32xbf16>
    %11 = vector.extract_strided_slice %8 {offsets = [0, 0, 32], sizes = [1, 8, 32], strides = [1, 1, 1]} : vector<1x8x96xf32> to vector<1x8x32xf32>
    %12 = arith.truncf %11 : vector<1x8x32xf32> to vector<1x8x32xbf16>
    %13 = vector.extract_strided_slice %8 {offsets = [0, 0, 64], sizes = [1, 8, 32], strides = [1, 1, 1]} : vector<1x8x96xf32> to vector<1x8x32xf32>
    %14 = arith.truncf %13 : vector<1x8x32xf32> to vector<1x8x32xbf16>
    "tpu.trace_start"() <{level = 10 : i32, message = "bqd,bkd->bqk"}> : () -> ()
    %cst_6 = arith.constant dense<0.000000e+00> : vector<1x8x8xf32>
    %15 = tpu.matmul %10, %12, %cst_6 {dimension_numbers = #tpu.dot_dimension_numbers<[2], [2], [1], [1], [0, 0, 0, 1, 1, 1], [0], [0]>} : vector<1x8x32xbf16>, vector<1x8x32xbf16>, vector<1x8x8xf32> -> vector<1x8x8xf32>
    "tpu.trace_stop"() : () -> ()
    %cst_7 = arith.constant dense<0xFF800000> : vector<1x8xf32>
    %16 = vector.multi_reduction <maximumf>, %15, %cst_7 [2] : vector<1x8x8xf32> to vector<1x8xf32>
    %17 = vector.shape_cast %16 : vector<1x8xf32> to vector<1x8x1xf32>
    %18 = vector.broadcast %17 : vector<1x8x1xf32> to vector<1x8x8xf32>
    %19 = arith.subf %15, %18 : vector<1x8x8xf32>
    %20 = math.exp %19 : vector<1x8x8xf32>
    %cst_8 = arith.constant dense<0.000000e+00> : vector<1x8xf32>
    %21 = vector.multi_reduction <add>, %20, %cst_8 [2] : vector<1x8x8xf32> to vector<1x8xf32>
    %22 = vector.shape_cast %21 : vector<1x8xf32> to vector<1x8x1xf32>
    %23 = tpu.reciprocal %22 {approx = true} : vector<1x8x1xf32> -> vector<1x8x1xf32>
    %24 = vector.broadcast %23 : vector<1x8x1xf32> to vector<1x8x8xf32>
    %25 = arith.mulf %20, %24 : vector<1x8x8xf32>
    %26 = arith.truncf %25 : vector<1x8x8xf32> to vector<1x8x8xbf16>
    "tpu.trace_start"() <{level = 10 : i32, message = "bqk,bkd->bqd"}> : () -> ()
    %cst_9 = arith.constant dense<0.000000e+00> : vector<1x8x32xf32>
    %27 = tpu.matmul %26, %14, %cst_9 {dimension_numbers = #tpu.dot_dimension_numbers<[2], [1], [1], [2], [0, 0, 0, 1, 1, 2], [0], [0]>} : vector<1x8x8xbf16>, vector<1x8x32xbf16>, vector<1x8x32xf32> -> vector<1x8x32xf32>
    "tpu.trace_stop"() : () -> ()
    %28 = vector.shape_cast %27 : vector<1x8x32xf32> to vector<8x32xf32>
    %c0_10 = arith.constant 0 : index
    %c0_11 = arith.constant 0 : index
    %29 = vector.load %arg7[%c0_10, %c0_11] : memref<8x32xf32, #tpu.memory_space<vmem>>, vector<8x32xf32>
    tpu.vector_store %arg7[%c0_10, %c0_11], %28 {strides = array<i32>} : memref<8x32xf32, #tpu.memory_space<vmem>>, vector<8x32xf32>,
    %c0_12 = arith.constant 0 : index
    %c0_13 = arith.constant 0 : index
    %30 = vector.load %arg7[%c0_12, %c0_13] : memref<8x32xf32, #tpu.memory_space<vmem>>, vector<8x32xf32>
    %31 = arith.truncf %30 : vector<8x32xf32> to vector<8x32xbf16>
    %c0_14 = arith.constant 0 : index
    %c0_15 = arith.constant 0 : index
    %32 = vector.load %arg4[%c0_14, %c0_15] : memref<32x32xbf16, #tpu.memory_space<vmem>>, vector<32x32xbf16>
    %cst_16 = arith.constant dense<0.000000e+00> : vector<8x32xf32>
    %33 = tpu.matmul %31, %32, %cst_16 {dimension_numbers = #tpu.dot_dimension_numbers<[1], [0], [0], [1], [0, 0, 1, 1], [], []>} : vector<8x32xbf16>, vector<32x32xbf16>, vector<8x32xf32> -> vector<8x32xf32>
    %c0_17 = arith.constant 0 : index
    %c0_18 = arith.constant 0 : index
    %34 = vector.load %arg5[%c0_17, %c0_18] : memref<1x32xf32, #tpu.memory_space<vmem>>, vector<1x32xf32>
    %35 = vector.broadcast %34 : vector<1x32xf32> to vector<8x32xf32>
    %36 = arith.addf %33, %35 : vector<8x32xf32>
    %37 = vector.shape_cast %36 : vector<8x32xf32> to vector<1x8x32xf32>
    %c0_19 = arith.constant 0 : index
    %c0_20 = arith.constant 0 : index
    %c0_21 = arith.constant 0 : index
    %38 = vector.load %arg6[%c0_19, %c0_20, %c0_21] : memref<1x8x32xf32, #tpu.memory_space<vmem>>, vector<1x8x32xf32>
    tpu.vector_store %arg6[%c0_19, %c0_20, %c0_21], %37 {strides = array<i32>} : memref<1x8x32xf32, #tpu.memory_space<vmem>>, vector<1x8x32xf32>,
    return
  }
  func.func @transform_0(%arg0: i32) -> (i32, i32, i32) {
    %c0_i32 = arith.constant 0 : i32
    %c0_i32_0 = arith.constant 0 : i32
    %c0_i32_1 = arith.constant 0 : i32
    return %arg0, %c0_i32, %c0_i32_0 : i32, i32, i32
  }
  func.func @transform_1(%arg0: i32) -> (i32, i32) {
    %c0_i32 = arith.constant 0 : i32
    %c0_i32_0 = arith.constant 0 : i32
    %c0_i32_1 = arith.constant 0 : i32
    return %c0_i32, %c0_i32_0 : i32, i32
  }
  func.func @transform_2(%arg0: i32) -> (i32, i32) {
    %c0_i32 = arith.constant 0 : i32
    %c0_i32_0 = arith.constant 0 : i32
    %c0_i32_1 = arith.constant 0 : i32
    return %c0_i32, %c0_i32_0 : i32, i32
  }
  func.func @transform_3(%arg0: i32) -> (i32, i32) {
    %c0_i32 = arith.constant 0 : i32
    %c0_i32_0 = arith.constant 0 : i32
    %c0_i32_1 = arith.constant 0 : i32
    return %c0_i32, %c0_i32_0 : i32, i32
  }
  func.func @transform_4(%arg0: i32) -> (i32, i32) {
    %c0_i32 = arith.constant 0 : i32
    %c0_i32_0 = arith.constant 0 : i32
    %c0_i32_1 = arith.constant 0 : i32
    return %c0_i32, %c0_i32_0 : i32, i32
  }
  func.func @transform_5(%arg0: i32) -> (i32, i32, i32) {
    %c0_i32 = arith.constant 0 : i32
    %c0_i32_0 = arith.constant 0 : i32
    %c0_i32_1 = arith.constant 0 : i32
    return %arg0, %c0_i32, %c0_i32_0 : i32, i32, i32
  }
}

</mosaic_0001>

<llo_original>
// kernel: tpu_custom_call.1
$region0: #{tpu_custom_call.1}
  #allocation0 [shape = 'u32[]', space=smem, size = 0x4, offset = 0x4, fixed_abs, tag = 'smem constant byte address 0x4 - core index']
  #allocation1 [shape = 'u32[72,128]{1,0:T(1,128)}', space=vmem, size = 0x9000, scoped, tag = 'internal scratch']
  #allocation2 [shape = 'f32[8,32]{1,0:T(8,128)}', space=vmem, size = 0x1000, scoped, tag = 'scratch operand']
  %s0 = inlined_call_operand.hbm [shape: f32[2,8,32], index: 0, kind: input, shape index: {}]
  %s1 = inlined_call_operand.hbm [shape: bf16[32,96], index: 1, kind: input, shape index: {}]
  %s2 = inlined_call_operand.vmem [shape: f32[1,96], index: 2, kind: input, shape index: {}]
  %s3 = inlined_call_operand.hbm [shape: bf16[32,32], index: 3, kind: input, shape index: {}]
  %s4 = inlined_call_operand.vmem [shape: f32[1,32], index: 4, kind: input, shape index: {}]
  %s5 = inlined_call_operand.hbm [shape: f32[2,8,32], index: 5, kind: output, shape index: {}]
  %s6 = sld [smem:[#allocation0]]
  $region65: #{tpu_custom_call.1} parent=0
    _
  %s8 = ssub.s32 1, %s6
  %s9 = scalar_select 0, %s8, %s6
  $region1: #{tpu_custom_call.1} parent=0
    #allocation3 [shape = 'u8[8192]{0}', space=vmem, size = 0x2000, scoped, tag = 'input window, operand 0']
    #allocation4 [shape = 's32[2]{0}', space=sflag, size = 0x8, scoped, tag = 'scoped memory for tpu_custom_call.1']
    #allocation5 [shape = 's32[2]{0}', space=sflag, size = 0x8, scoped, tag = 'scoped memory for tpu_custom_call.1']
    #allocation6 [shape = 'u8[8192]{0}', space=vmem, size = 0x2000, scoped, tag = 'input window, operand 1, single buffered']
    #allocation7 [shape = 's32[1]{0}', space=sflag, size = 0x4, scoped, tag = 'scoped memory for tpu_custom_call.1']
    #allocation8 [shape = 'u8[8192]{0}', space=vmem, size = 0x2000, scoped, tag = 'input window, operand 3, single buffered']
    #allocation9 [shape = 'u8[8192]{0}', space=vmem, size = 0x2000, scoped, tag = 'output window, operand 0']
    %10 = vsyncpa [#allocation4], 0
    %s11 = scalar_lea.sflag [#allocation4], 1
    %12 = vsyncpa %s11, 0
    %13 = vsyncpa [#allocation7], 0
    %14 = vsyncpa [#allocation5], 0
    %s15 = scalar_lea.sflag [#allocation5], 1
    %16 = vsyncpa %s15, 0
    loop: start=0, step=1, limit=4
    $region2: #{tpu_custom_call.1} parent=1 // loop_pre_header
      _
    $region3: #{tpu_custom_call.1} parent=1 // loop_header
      %s18 = sphi 0, %s22
      %p19 = scmp.ge.s32.totalorder %s18, 4
      %s28 = sphi 0, %s30
      %s31 = sphi 0, %s28
      %s32 = sphi 0, %s31
      %s48 = sphi 0, %s32
      %s52 = sphi 0, %s52
      %s54 = sphi 0, %s52
      %s55 = sphi 0, %s54
      %s69 = sphi 0, %s55
      %s73 = sphi 0, %s73
      %s75 = sphi 0, %s73
      %s76 = sphi 0, %s75
      %s90 = sphi 0, %s76
      %s94 = sphi 0, %s94
      %s96 = sphi 0, %s94
      %s97 = sphi 0, %s96
      %s111 = sphi 0, %s97
      %s115 = sphi 0, %s115
      %s117 = sphi 0, %s115
      %s118 = sphi 0, %s117
      %s132 = sphi 0, %s118
      %s138 = sphi 0, %s140
      %s141 = sphi 0, %s138
      %s142 = sphi 0, %s141
      %s158 = sphi 0, %s142
    $region4: #{tpu_custom_call.1} parent=1 // loop_header_branch
      %21 = sbr.rel (%p19) target = $region8
    $region5: #{tpu_custom_call.1} parent=1 // loop_body
      %s23 = ssub.s32 %s18, 1
      %s24 = ssub.s32 %s18, 2
      %s25 = sadd.s32 %s18, 1
      %s26 = ssub.s32 %s18, %s25
      %p27 = scmp.eq.s32.totalorder %s26, 0
      %s29 = sadd.s32 %s28, 1
      %s30 = scalar_select %p27, %s28, %s29
      %p33 = pneg %p27
      %p34 = scmp.eq.s32.totalorder %s18, 1
      %p35 = por %p33, %p34
      %p36 = scmp.ne.s32.totalorder %s28, %s31
      %p37 = scmp.eq.s32.totalorder %s18, 0
      %p38 = por %p36, %p37
      %p39 = scmp.ne.s32.totalorder %s28, %s31
      %p40 = scmp.eq.s32.totalorder %s23, 1
      %p41 = por %p39, %p40
      %p42 = scmp.ne.s32.totalorder %s31, %s32
      %p43 = scmp.eq.s32.totalorder %s23, 0
      %p44 = por %p42, %p43
      %p45 = scmp.ne.s32.totalorder %s31, %s32
      %p46 = scmp.eq.s32.totalorder %s24, 1
      %p47 = por %p45, %p46
      %p49 = scmp.ne.s32.totalorder %s32, %s48
      %p50 = scmp.eq.s32.totalorder %s24, 0
      %p51 = por %p49, %p50
      %s53 = sadd.s32 %s52, 1
      %p56 = scmp.eq.s32.totalorder %s18, 1
      %p57 = scmp.ne.s32.totalorder %s52, %s54
      %p58 = scmp.eq.s32.totalorder %s18, 0
      %p59 = por %p57, %p58
      %p60 = scmp.ne.s32.totalorder %s52, %s54
      %p61 = scmp.eq.s32.totalorder %s23, 1
      %p62 = por %p60, %p61
      %p63 = scmp.ne.s32.totalorder %s54, %s55
      %p64 = scmp.eq.s32.totalorder %s23, 0
      %p65 = por %p63, %p64
      %p66 = scmp.ne.s32.totalorder %s54, %s55
      %p67 = scmp.eq.s32.totalorder %s24, 1
      %p68 = por %p66, %p67
      %p70 = scmp.ne.s32.totalorder %s55, %s69
      %p71 = scmp.eq.s32.totalorder %s24, 0
      %p72 = por %p70, %p71
      %s74 = sadd.s32 %s73, 1
      %p77 = scmp.eq.s32.totalorder %s18, 1
      %p78 = scmp.ne.s32.totalorder %s73, %s75
      %p79 = scmp.eq.s32.totalorder %s18, 0
      %p80 = por %p78, %p79
      %p81 = scmp.ne.s32.totalorder %s73, %s75
      %p82 = scmp.eq.s32.totalorder %s23, 1
      %p83 = por %p81, %p82
      %p84 = scmp.ne.s32.totalorder %s75, %s76
      %p85 = scmp.eq.s32.totalorder %s23, 0
      %p86 = por %p84, %p85
      %p87 = scmp.ne.s32.totalorder %s75, %s76
      %p88 = scmp.eq.s32.totalorder %s24, 1
      %p89 = por %p87, %p88
      %p91 = scmp.ne.s32.totalorder %s76, %s90
      %p92 = scmp.eq.s32.totalorder %s24, 0
      %p93 = por %p91, %p92
      %s95 = sadd.s32 %s94, 1
      %p98 = scmp.eq.s32.totalorder %s18, 1
      %p99 = scmp.ne.s32.totalorder %s94, %s96
      %p100 = scmp.eq.s32.totalorder %s18, 0
      %p101 = por %p99, %p100
      %p102 = scmp.ne.s32.totalorder %s94, %s96
      %p103 = scmp.eq.s32.totalorder %s23, 1
      %p104 = por %p102, %p103
      %p105 = scmp.ne.s32.totalorder %s96, %s97
      %p106 = scmp.eq.s32.totalorder %s23, 0
      %p107 = por %p105, %p106
      %p108 = scmp.ne.s32.totalorder %s96, %s97
      %p109 = scmp.eq.s32.totalorder %s24, 1
      %p110 = por %p108, %p109
      %p112 = scmp.ne.s32.totalorder %s97, %s111
      %p113 = scmp.eq.s32.totalorder %s24, 0
      %p114 = por %p112, %p113
      %s116 = sadd.s32 %s115, 1
      %p119 = scmp.eq.s32.totalorder %s18, 1
      %p120 = scmp.ne.s32.totalorder %s115, %s117
      %p121 = scmp.eq.s32.totalorder %s18, 0
      %p122 = por %p120, %p121
      %p123 = scmp.ne.s32.totalorder %s115, %s117
      %p124 = scmp.eq.s32.totalorder %s23, 1
      %p125 = por %p123, %p124
      %p126 = scmp.ne.s32.totalorder %s117, %s118
      %p127 = scmp.eq.s32.totalorder %s23, 0
      %p128 = por %p126, %p127
      %p129 = scmp.ne.s32.totalorder %s117, %s118
      %p130 = scmp.eq.s32.totalorder %s24, 1
      %p131 = por %p129, %p130
      %p133 = scmp.ne.s32.totalorder %s118, %s132
      %p134 = scmp.eq.s32.totalorder %s24, 0
      %p135 = por %p133, %p134
      %s136 = ssub.s32 %s18, %s25
      %p137 = scmp.eq.s32.totalorder %s136, 0
      %s139 = sadd.s32 %s138, 1
      %s140 = scalar_select %p137, %s138, %s139
      %p143 = pneg %p137
      %p144 = scmp.eq.s32.totalorder %s18, 1
      %p145 = por %p143, %p144
      %p146 = scmp.ne.s32.totalorder %s138, %s141
      %p147 = scmp.eq.s32.totalorder %s18, 0
      %p148 = por %p146, %p147
      %p149 = scmp.ne.s32.totalorder %s138, %s141
      %p150 = scmp.eq.s32.totalorder %s23, 1
      %p151 = por %p149, %p150
      %p152 = scmp.ne.s32.totalorder %s141, %s142
      %p153 = scmp.eq.s32.totalorder %s23, 0
      %p154 = por %p152, %p153
      %p155 = scmp.ne.s32.totalorder %s141, %s142
      %p156 = scmp.eq.s32.totalorder %s24, 1
      %p157 = por %p155, %p156
      %p159 = scmp.ne.s32.totalorder %s142, %s158
      %p160 = scmp.eq.s32.totalorder %s24, 0
      %p161 = por %p159, %p160
      %p162 = scmp.le.s32.totalorder 1, %s18
      %p163 = scmp.lt.s32.totalorder %s18, 3
      %p164 = pnand %p162, %p163
      %p165 = pneg %p164
      // Predicated region
      $region9: #{tpu_custom_call.1} parent=5 // pred_check
        _
      $region10: #{tpu_custom_call.1} parent=5 // pred_check_branch
        %167 = sbr.rel (%p164) target = $region12
      $region11: #{tpu_custom_call.1} parent=5 // pred_region
        %s168 = ssub.s32 %s18, 1
        // Predicated region
        $region13: #{tpu_custom_call.1} parent=11 // pred_check
          %p169 = pneg %p65
        $region14: #{tpu_custom_call.1} parent=11 // pred_check_branch
          %171 = sbr.rel (%p169) target = $region16
        $region15: #{tpu_custom_call.1} parent=11 // pred_region
          %173 = vsyncadd [#allocation7], 0
          %s174 = sshll.u32 %s1, 4
          %s175 = int_to_ptr.hbm [resolvable:$true] %s174
          %s176 = sshll.u32 [#allocation6], 4
          %s177 = int_to_ptr.vmem [resolvable:$true] %s176
          %182 = dma.hbm_to_vmem [thread:$0]  %s175, 256, %s177, [#allocation7], 64, 64, 4
        $region16: #{tpu_custom_call.1} parent=11 // pred_fallthru
          _
        // Predicated region
        $region17: #{tpu_custom_call.1} parent=11 // pred_check
          %p183 = pneg %p86
        $region18: #{tpu_custom_call.1} parent=11 // pred_check_branch
          %185 = sbr.rel (%p183) target = $region20
        $region19: #{tpu_custom_call.1} parent=11 // pred_region
          _
        $region20: #{tpu_custom_call.1} parent=11 // pred_fallthru
          _
        // Predicated region
        $region21: #{tpu_custom_call.1} parent=11 // pred_check
          %p186 = pneg %p107
        $region22: #{tpu_custom_call.1} parent=11 // pred_check_branch
          %188 = sbr.rel (%p186) target = $region24
        $region23: #{tpu_custom_call.1} parent=11 // pred_region
          %190 = vsyncadd [#allocation7], 0
          %s191 = sshll.u32 %s3, 4
          %s192 = int_to_ptr.hbm [resolvable:$true] %s191
          %s193 = sshll.u32 [#allocation8], 4
          %s194 = int_to_ptr.vmem [resolvable:$true] %s193
          %199 = dma.hbm_to_vmem [thread:$0]  %s192, 256, %s194, [#allocation7], 64, 64, 4
        $region24: #{tpu_custom_call.1} parent=11 // pred_fallthru
          _
        // Predicated region
        $region25: #{tpu_custom_call.1} parent=11 // pred_check
          %p200 = pneg %p128
        $region26: #{tpu_custom_call.1} parent=11 // pred_check_branch
          %202 = sbr.rel (%p200) target = $region28
        $region27: #{tpu_custom_call.1} parent=11 // pred_region
          _
        $region28: #{tpu_custom_call.1} parent=11 // pred_fallthru
          _
      $region12: #{tpu_custom_call.1} parent=5 // pred_fallthru
        _
      %p203 = scmp.lt.s32.totalorder %s18, 2
      // Predicated region
      $region29: #{tpu_custom_call.1} parent=5 // pred_check
        %p204 = pneg %p203
      $region30: #{tpu_custom_call.1} parent=5 // pred_check_branch
        %206 = sbr.rel (%p204) target = $region32
      $region31: #{tpu_custom_call.1} parent=5 // pred_region
        // Predicated region
        $region33: #{tpu_custom_call.1} parent=31 // pred_check
          %p207 = pneg %p38
        $region34: #{tpu_custom_call.1} parent=31 // pred_check_branch
          %209 = sbr.rel (%p207) target = $region36
        $region35: #{tpu_custom_call.1} parent=31 // pred_region
          %s210 = sand.u32 %s28, 1
          %s211 = scalar_lea.sflag [#allocation4], %s210
          %s212 = sand.u32 %s28, 1
          %s213 = smul.addr %s212, 8
          %s214 = scalar_lea.vmem [#allocation3], %s213
          %216 = vsyncadd %s211, 0
          %s217 = smul.addr %s18, 8
          %s218 = scalar_lea.hbm %s0, %s217
          %s220 = sshll.u32 %s218, 4
          %s221 = int_to_ptr.hbm [resolvable:$true] %s220
          %s222 = sshll.u32 %s214, 4
          %s223 = int_to_ptr.vmem [resolvable:$true] %s222
          %225 = dma.hbm_to_vmem [thread:$0]  %s221, 128, %s223, %s211
        $region36: #{tpu_custom_call.1} parent=31 // pred_fallthru
          _
      $region32: #{tpu_custom_call.1} parent=5 // pred_fallthru
        _
      %p226 = scmp.le.s32.totalorder 1, %s18
      %p227 = scmp.lt.s32.totalorder %s18, 3
      %p228 = pnand %p226, %p227
      %p229 = pneg %p228
      // Predicated region
      $region37: #{tpu_custom_call.1} parent=5 // pred_check
        _
      $region38: #{tpu_custom_call.1} parent=5 // pred_check_branch
        %231 = sbr.rel (%p228) target = $region40
      $region39: #{tpu_custom_call.1} parent=5 // pred_region
        %s232 = ssub.s32 %s18, 1
        %s233 = sand.u32 %s31, 1
        %s234 = scalar_lea.sflag [#allocation4], %s233
        %s235 = sand.u32 %s31, 1
        %s236 = smul.addr %s235, 8
        %s237 = scalar_lea.vmem [#allocation3], %s236
        // Predicated region
        $region41: #{tpu_custom_call.1} parent=39 // pred_check
          %p238 = pneg %p44
        $region42: #{tpu_custom_call.1} parent=39 // pred_check_branch
          %240 = sbr.rel (%p238) target = $region44
        $region43: #{tpu_custom_call.1} parent=39 // pred_region
          %242 = dma.done %s234, 128
        $region44: #{tpu_custom_call.1} parent=39 // pred_fallthru
          _
        // Predicated region
        $region45: #{tpu_custom_call.1} parent=39 // pred_check
          %p243 = pneg %p65
        $region46: #{tpu_custom_call.1} parent=39 // pred_check_branch
          %245 = sbr.rel (%p243) target = $region48
        $region47: #{tpu_custom_call.1} parent=39 // pred_region
          %247 = dma.done [#allocation7], 256
        $region48: #{tpu_custom_call.1} parent=39 // pred_fallthru
          _
        // Predicated region
        $region49: #{tpu_custom_call.1} parent=39 // pred_check
          %p248 = pneg %p107
        $region50: #{tpu_custom_call.1} parent=39 // pred_check_branch
          %250 = sbr.rel (%p248) target = $region52
        $region51: #{tpu_custom_call.1} parent=39 // pred_region
          %252 = dma.done [#allocation7], 256
        $region52: #{tpu_custom_call.1} parent=39 // pred_fallthru
          _
        %s253 = sand.u32 %s31, 1
        %s254 = scalar_lea.sflag [#allocation4], %s253
        %s255 = sand.u32 %s31, 1
        %s256 = smul.addr %s255, 8
        %s257 = scalar_lea.vmem [#allocation3], %s256
        %p258 = pneg %p44
        %p259 = pneg %p41
        %p260 = pneg %p65
        %p261 = pneg %p62
        %p262 = pneg %p86
        %p263 = pneg %p83
        %p264 = pneg %p107
        %p265 = pneg %p104
        %p266 = pneg %p128
        %p267 = pneg %p125
        %p268 = pneg %p154
        %p269 = pneg %p151
        %s270 = sand.u32 %s141, 1
        %s271 = scalar_lea.sflag [#allocation5], %s270
        %s272 = sand.u32 %s141, 1
        %s273 = smul.addr %s272, 8
        %s274 = scalar_lea.vmem [#allocation9], %s273
        %v276 = vld [vmem:[%s237] sm:$0xff]
        %v277 = vpack.c.bf16 %v276, %v276
        %v278 = vld [vmem:[#allocation6] sm:$0xf]
        %v279 = vld [vmem:[#allocation6 + $0x4] sm:$0xf]
        %v280 = vld [vmem:[#allocation6 + $0x8] sm:$0xf]
        %v281 = vld [vmem:[#allocation6 + $0xc] sm:$0xf]
        %v282 = vld [vmem:[%s2] sm:$0x1]
        %v284 = vperm.slane %v282, 0
        %v290 = vunpack.c.l.b16 %v278
        %v291 = vunpack.c.l.b16 %v279
        %v292 = vunpack.c.l.b16 %v280
        %v293 = vunpack.c.l.b16 %v281
        %v294 = vpack.c.b16 %v291, %v290
        %v295 = vpack.c.b16 %v293, %v292
        %vm298 = vcmask 261120
        %v300 = vsel %vm298, %v277, 0
        %302 = vmatpush.bf16.msra.mxu0 0
        %303 = vmatpush.bf16.msra.mxu0 0
        %304 = vmatpush.bf16.msra.mxu0 0
        %305 = vmatpush.bf16.msra.mxu0 0
        %306 = vmatpush.bf16.msra.mxu0 0
        %307 = vmatpush.bf16.msra.mxu0 0
        %308 = vmatpush.bf16.msra.mxu0 %v295
        %309 = vmatpush.bf16.msra.mxu0 %v294
        %310 = vmatmul.bf16.gmra.mxu0 %v300
        %v311 = vpop.f32.mrf.mxu0
        %v312 = vadd.f32 %v284, %v311
        %v313 = vpop.f32.mrf.mxu0
        %314 = vdwg.mxu0
        %v315 = vpack.c.bf16 %v312, %v312
        %v317 = vunpack.c.l.b16 %v315
        %v318 = vpack.c.b16 %v317, %v317
        %319 = vrot.lane.b32.xlu0 %v318, 96
        %v320 = vpop.permute.xlu0 %319
        %v322 = vsel %vm298, %v315, 0
        %v325 = vsel %vm298, %v320, 0
        %327 = vmatpush.bf16.xpose.msra.mxu0 0
        %328 = vmatpush.bf16.xpose.msra.mxu0 0
        %329 = vmatpush.bf16.xpose.msra.mxu0 0
        %330 = vmatpush.bf16.xpose.msra.mxu0 0
        %331 = vmatpush.bf16.xpose.msra.mxu0 0
        %332 = vmatpush.bf16.xpose.msra.mxu0 0
        %333 = vmatpush.bf16.xpose.msra.mxu0 0
        %334 = vmatpush.bf16.xpose.msra.mxu0 %v325
        %335 = vmatmul.bf16.gmra.mxu0 %v322
        %v336 = vpop.f32.mrf.mxu0
        %v337 = vadd.f32 0.0, %v336
        %v338 = vpop.f32.mrf.mxu0
        %339 = vdwg.mxu0
        %vm340 = vcmask 64512
        %v341 = vsel %vm340, %v337, -inf
        %342 = vmax.xlane.f32.xlu0 %v341
        %v343 = vpop.xlane.xlu0 %342
        %v344 = vsub.f32 %v337, %v343
        %v345 = vmul.f32 %v344, 1.442695
        %v346 = vpow.pop %v345
        %v347 = vsel %vm340, %v346, 0.0
        %348 = vadd.xlane.f32.xlu0 %v347
        %v349 = vpop.xlane.xlu0 %348
        %v350 = vrcp.pop %v349
        %v351 = vmul.f32 %v346, %v350
        %v352 = vpack.c.bf16 %v351, %v351
        %353 = vrot.lane.b32.xlu0 %v318, 64
        %v354 = vpop.permute.xlu0 %353
        %v356 = vsel %vm340, %v352, 0
        %vm358 = vcmask 1043456
        %v360 = vsel %vm358, %v354, 0
        %362 = vmatpush.bf16.msra.mxu0 0
        %363 = vmatpush.bf16.msra.mxu0 0
        %364 = vmatpush.bf16.msra.mxu0 0
        %365 = vmatpush.bf16.msra.mxu0 0
        %366 = vmatpush.bf16.msra.mxu0 0
        %367 = vmatpush.bf16.msra.mxu0 0
        %368 = vmatpush.bf16.msra.mxu0 0
        %369 = vmatpush.bf16.msra.mxu0 %v360
        %370 = vmatmul.bf16.gmra.mxu0 %v356
        %v371 = vpop.f32.mrf.mxu0
        %v372 = vadd.f32 0.0, %v371
        %v373 = vpop.f32.mrf.mxu0
        %374 = vdwg.mxu0
        %375 = vst.msk [vmem:[#allocation2] sm:$0xff] %vm298, %v372
        %v376 = vld [vmem:[#allocation2] sm:$0xff]
        %v377 = vpack.c.bf16 %v376, %v376
        %v378 = vld [vmem:[#allocation8] sm:$0xf]
        %v379 = vld [vmem:[#allocation8 + $0x4] sm:$0xf]
        %v380 = vld [vmem:[#allocation8 + $0x8] sm:$0xf]
        %v381 = vld [vmem:[#allocation8 + $0xc] sm:$0xf]
        %v382 = vld [vmem:[%s4] sm:$0x1]
        %v384 = vperm.slane %v382, 0
        %v390 = vunpack.c.l.b16 %v378
        %v391 = vunpack.c.l.b16 %v379
        %v392 = vunpack.c.l.b16 %v380
        %v393 = vunpack.c.l.b16 %v381
        %v394 = vpack.c.b16 %v391, %v390
        %v395 = vpack.c.b16 %v393, %v392
        %v399 = vsel %vm298, %v377, 0
        %401 = vmatpush.bf16.msra.mxu0 0
        %402 = vmatpush.bf16.msra.mxu0 0
        %403 = vmatpush.bf16.msra.mxu0 0
        %404 = vmatpush.bf16.msra.mxu0 0
        %405 = vmatpush.bf16.msra.mxu0 0
        %406 = vmatpush.bf16.msra.mxu0 0
        %407 = vmatpush.bf16.msra.mxu0 %v395
        %408 = vmatpush.bf16.msra.mxu0 %v394
        %409 = vmatmul.bf16.gmra.mxu0 %v399
        %v410 = vpop.f32.mrf.mxu0
        %v411 = vadd.f32 %v384, %v410
        %v412 = vpop.f32.mrf.mxu0
        %413 = vdwg.mxu0
        %414 = vst.msk [vmem:[%s274] sm:$0xff] %vm298, %v411
        %s415 = sand.u32 %s141, 1
        %s416 = scalar_lea.sflag [#allocation5], %s415
        %s417 = sand.u32 %s141, 1
        %s418 = smul.addr %s417, 8
        %s419 = scalar_lea.vmem [#allocation9], %s418
        // Predicated region
        $region53: #{tpu_custom_call.1} parent=39 // pred_check
          %p420 = pneg %p151
        $region54: #{tpu_custom_call.1} parent=39 // pred_check_branch
          %422 = sbr.rel (%p420) target = $region56
        $region55: #{tpu_custom_call.1} parent=39 // pred_region
          %424 = vsyncadd %s416, 0
          %s425 = smul.addr %s23, 8
          %s426 = scalar_lea.hbm %s5, %s425
          %s428 = sshll.u32 %s419, 4
          %s429 = int_to_ptr.vmem [resolvable:$true] %s428
          %s430 = sshll.u32 %s426, 4
          %s431 = int_to_ptr.hbm [resolvable:$true] %s430
          %433 = dma.vmem_to_hbm [thread:$0]  %s429, 128, %s431, %s416
        $region56: #{tpu_custom_call.1} parent=39 // pred_fallthru
          _
      $region40: #{tpu_custom_call.1} parent=5 // pred_fallthru
        _
      %p434 = scmp.le.s32.totalorder 2, %s18
      // Predicated region
      $region57: #{tpu_custom_call.1} parent=5 // pred_check
        %p435 = pneg %p434
      $region58: #{tpu_custom_call.1} parent=5 // pred_check_branch
        %437 = sbr.rel (%p435) target = $region60
      $region59: #{tpu_custom_call.1} parent=5 // pred_region
        %s438 = ssub.s32 %s18, 2
        // Predicated region
        $region61: #{tpu_custom_call.1} parent=59 // pred_check
          %p439 = pneg %p157
        $region62: #{tpu_custom_call.1} parent=59 // pred_check_branch
          %441 = sbr.rel (%p439) target = $region64
        $region63: #{tpu_custom_call.1} parent=59 // pred_region
          %s442 = sand.u32 %s142, 1
          %s443 = scalar_lea.sflag [#allocation5], %s442
          %s444 = sand.u32 %s142, 1
          %s445 = smul.addr %s444, 8
          %s446 = scalar_lea.vmem [#allocation9], %s445
          %448 = dma.done %s443, 128
        $region64: #{tpu_custom_call.1} parent=59 // pred_fallthru
          _
      $region60: #{tpu_custom_call.1} parent=5 // pred_fallthru
        _
    $region6: #{tpu_custom_call.1} parent=1 // loop_footer
      %s22 = sadd.s32 1, %s18
    $region7: #{tpu_custom_call.1} parent=1 // loop_footer_branch
      %17 = sbr.rel target = $region3
    $region8: #{tpu_custom_call.1} parent=1 // loop_exit
      _
    %449 = vsyncpa [#allocation4], 1
    %s450 = scalar_lea.sflag [#allocation4], 1
    %451 = vsyncpa %s450, 1
    %452 = vsyncpa [#allocation7], 1
    %453 = vsyncpa [#allocation5], 1
    %s454 = scalar_lea.sflag [#allocation5], 1
    %455 = vsyncpa %s454, 1

</llo_original>
